<compile_context>
chip_gen: v5e
topology: v5e:2x2
jax: 0.10.0
libtpu: 0.0.40
codegen_flags: <defaults>
</compile_context>

<pallas_src>
import functools

import jax
import jax.numpy as jnp
import numpy as np
from jax.experimental import pallas as pl
from jax.experimental.pallas import tpu as pltpu


def _nbytes(shape, dtype):
    return int(np.prod(shape)) * np.dtype(dtype).itemsize


@functools.lru_cache(maxsize=None)
def _roll_matches_jnp() -> bool:
    """pltpu.roll is documented to follow jnp.roll semantics; verify the sign
    convention once at runtime so a flip cannot silently mirror the stencil."""
    def k(x_ref, o_ref):
        o_ref[...] = pltpu.roll(x_ref[...], shift=1, axis=1)

    x = jax.lax.broadcasted_iota(jnp.float32, (8, 128), 1)
    y = pl.pallas_call(k, out_shape=jax.ShapeDtypeStruct((8, 128), jnp.float32))(x)
    # jnp.roll(v, 1) puts v[0] at index 1.
    return bool(y[0, 1] == 0.0)


# ---------------------------------------------------------------------------
# Fused decoder-block kernel:
#   y = conv2(conv1(concat(upsample2x(x), skip)))      (conv = 3x3 + BN + ReLU)
#   [+ final 1x1 conv with bias for the last block]
# All data movement (upsample, concat, halo, im2col) stays in VMEM.
# ---------------------------------------------------------------------------
def _make_block_kernel(H, W, has_skip, has_final, roll_fwd):
    HW = H * W
    hw = (H // 2) * (W // 2)

    def kernel(*refs):
        it = iter(refs)
        idx_ref = next(it)
        x_ref = next(it)
        skip_ref = next(it) if has_skip else None
        w1_ref, b1_ref, w2_ref, b2_ref = next(it), next(it), next(it), next(it)
        wf_ref = next(it) if has_final else None
        bf_ref = next(it) if has_final else None
        o_ref = next(it)

        f32, bf16 = jnp.float32, jnp.bfloat16

        # --- per-call constants (built once, shared by conv1 and conv2) -----
        idx = idx_ref[...]                              # (3, HW) int32
        xi, yi, src = idx[0:1], idx[1:2], idx[2:3]      # (1, HW) each
        col_lo, col_hi = xi >= 1, xi <= W - 2
        row_lo, row_hi = yi >= 1, yi <= H - 2
        masks = {
            (-1, -1): row_lo & col_lo, (-1, 0): row_lo, (-1, 1): row_lo & col_hi,
            (0, -1): col_lo,           (0, 0): None,    (0, 1): col_hi,
            (1, -1): row_hi & col_lo,  (1, 0): row_hi,  (1, 1): row_hi & col_hi,
        }

        # --- nearest 2x upsample as one matmul with a 0/1 expansion matrix --
        lo = jax.lax.broadcasted_iota(jnp.int32, (hw, HW), 0)
        expand = jnp.where(lo == src, 1.0, 0.0).astype(bf16)        # (hw, HW)
        x = x_ref[0]                                                # (Cx, hw) bf16
        xu = jnp.dot(x, expand, preferred_element_type=f32).astype(bf16)
        if has_skip:
            # torch.cat([x, skip], dim=1): upsampled x channels first.
            xu = jnp.concatenate([xu, skip_ref[0]], axis=0)

        def conv3x3_bn_relu(x_cm, w_ref, b_ref):
            """x_cm: (Cin, HW) bf16  ->  relu(W @ patches + b): (Cout, HW) f32."""
            taps = []
            for oy in (-1, 0, 1):
                for ox in (-1, 0, 1):
                    s = oy * W + ox
                    if s == 0:
                        t = x_cm
                    else:
                        shift = ((-s) % HW) if roll_fwd else (s % HW)
                        t = pltpu.roll(x_cm, shift=shift, axis=1)   # XLU shift
                    m = masks[(oy, ox)]
                    if m is not None:                               # halo (pad=1)
                        t = jnp.where(m, t, jnp.zeros_like(t))
                    taps.append(t)
            patches = jnp.concatenate(taps, axis=0)                 # (9*Cin, HW) bf16
            acc = jnp.dot(w_ref[...], patches, preferred_element_type=f32)
            return jnp.maximum(acc + b_ref[...], 0.0)               # f32 bias + ReLU

        y1 = conv3x3_bn_relu(xu, w1_ref, b1_ref).astype(bf16)
        y2 = conv3x3_bn_relu(y1, w2_ref, b2_ref)

        if has_final:                                   # fused final 1x1 conv
            yf = jnp.dot(wf_ref[...], y2.astype(bf16),
                         preferred_element_type=f32) + bf_ref[...]
            o_ref[0] = yf.astype(o_ref.dtype)
        else:
            o_ref[0] = y2.astype(o_ref.dtype)

    return kernel


def _decoder_block_call(x, skip, conv1, conv2, final, H, W, roll_fwd):
    """One fused decoder block.  x: (N, Cx, H*W/4) bf16, skip: (N, Cs, H*W) bf16
    or None, final: dict or None.  Returns (N, Cout, H*W)."""
    N, Cx, hw_in = x.shape
    HW = H * W
    assert H % 2 == 0 and W % 2 == 0 and hw_in == HW // 4, (H, W, hw_in)

    # Tiny per-position int32 table: x coord, y coord, nearest-upsample source
    # index.  Avoids in-kernel integer div/mod and lane-merging reshapes.
    yy, xx = np.meshgrid(np.arange(H), np.arange(W), indexing="ij")
    src = (yy // 2) * (W // 2) + (xx // 2)
    idx = jnp.asarray(
        np.stack([xx.reshape(-1), yy.reshape(-1), src.reshape(-1)], 0),
        dtype=jnp.int32)                                            # (3, HW)

    has_skip = skip is not None
    has_final = final is not None
    w1, b1 = conv1["w_cm"], conv1["b_col"]
    w2, b2 = conv2["w_cm"], conv2["b_col"]
    c1 = w1.shape[0]
    cout = final["w_cm"].shape[0] if has_final else c1
    out_dtype = jnp.float32 if has_final else jnp.bfloat16

    operands = [idx, x]
    in_specs = [pl.BlockSpec(idx.shape, lambda n: (0, 0)),
                pl.BlockSpec((1, Cx, hw_in), lambda n: (n, 0, 0))]
    if has_skip:
        operands.append(skip)
        in_specs.append(pl.BlockSpec((1,) + skip.shape[1:], lambda n: (n, 0, 0)))
    params = [w1, b1, w2, b2]
    if has_final:
        params += [final["w_cm"], final["b_col"]]
    operands += params
    in_specs += [pl.BlockSpec(p.shape, lambda n: (0, 0)) for p in params]

    # Explicit VMEM budget: double-buffered I/O blocks + in-kernel temporaries
    # (expansion matrix, bf16 taps/patches, f32 accumulators) with 2x headroom,
    # clamped to [32 MiB, 64 MiB] so it is valid on v5e / v6e / v7x.
    cin1 = Cx + (skip.shape[1] if has_skip else 0)
    cmax = max(cin1, c1)
    io_bytes = (_nbytes(idx.shape, jnp.int32)
                + _nbytes((1, Cx, hw_in), x.dtype)
                + (_nbytes((1,) + skip.shape[1:], skip.dtype) if has_skip else 0)
                + sum(_nbytes(p.shape, p.dtype) for p in params)
                + _nbytes((1, cout, HW), out_dtype))
    tmp_bytes = (hw_in * HW * 2                # upsample expansion matrix (bf16)
                 + 2 * (9 * cmax * HW * 2)     # taps + patch matrix (bf16)
                 + 4 * (cmax * HW * 4))        # f32 accumulators / epilogue
    vmem_limit = int(min(64 * 2**20, max(32 * 2**20, 2 * (2 * io_bytes + tmp_bytes))))

    kernel = _make_block_kernel(H, W, has_skip, has_final, roll_fwd)
    return pl.pallas_call(
        kernel,
        out_shape=jax.ShapeDtypeStruct((N, cout, HW), out_dtype),
        grid=(N,),
        in_specs=in_specs,
        out_specs=pl.BlockSpec((1, cout, HW), lambda n: (n, 0, 0)),
        compiler_params=pltpu.CompilerParams(
            dimension_semantics=("parallel",),      # N=2 feeds both v7x TCs
            vmem_limit_bytes=vmem_limit),
    )(*operands)


# ---------------------------------------------------------------------------
# Parameters (mirrors UnetDecoder.__init__ / _init_weight, inference-mode BN
# folded into the conv weights).
# ---------------------------------------------------------------------------
def init_unet_decoder_params(key, encoder_channels, decoder_channels,
                             final_channels):
    eps = 1e-5
    in_channels = [ic + sc for ic, sc in zip(
        [encoder_channels[0]] + list(decoder_channels[:-1]),
        list(encoder_channels[1:]) + [0])]
    blocks = []
    for ci_blk, co_blk in zip(in_channels, decoder_channels):
        convs = []
        for ci, co in ((ci_blk, co_blk), (co_blk, co_blk)):
            key, kw = jax.random.split(key)
            wt = (jax.random.normal(kw, (co, ci, 3, 3), jnp.float32)
                  * np.sqrt(2.0 / (ci * 9)))                # kaiming_normal_
            gamma = jnp.ones((co,), jnp.float32)            # BN weight = 1
            beta = jnp.zeros((co,), jnp.float32)            # BN bias   = 0
            mean = jnp.zeros((co,), jnp.float32)
            var = jnp.ones((co,), jnp.float32)
            scale = gamma / jnp.sqrt(var + eps)
            wt = wt * scale[:, None, None, None]            # fold BN scale
            bias = beta - mean * scale
            # bf16 round-trip so kernel (bf16 MXU operands) and the f32
            # reference share the exact same effective weights.
            wt = wt.astype(jnp.bfloat16).astype(jnp.float32)
            convs.append({
                # (Cout, 9*Cin), tap-major (ky, kx) to match the kernel's
                # patch concatenation order.
                "w_cm": jnp.transpose(wt, (0, 2, 3, 1)).reshape(co, 9 * ci)
                          .astype(jnp.bfloat16),
                "b_col": bias.reshape(co, 1),
                "w_oihw": wt, "b": bias})
        blocks.append(convs)

    key, kw, kb = jax.random.split(key, 3)
    clast = decoder_channels[-1]
    wf = (jax.random.normal(kw, (final_channels, clast, 1, 1), jnp.float32)
          * np.sqrt(2.0 / clast))                           # kaiming_normal_
    wf = wf.astype(jnp.bfloat16).astype(jnp.float32)
    bound = 1.0 / np.sqrt(clast)                            # default conv bias
    bf = jax.random.uniform(kb, (final_channels,), jnp.float32,
                            minval=-bound, maxval=bound)
    final = {"w_cm": wf.reshape(final_channels, clast).astype(jnp.bfloat16),
             "b_col": bf.reshape(final_channels, 1),
             "w_oihw": wf, "b": bf}
    return blocks, final


# ---------------------------------------------------------------------------
# UnetDecoder.forward (center=False -> Identity)
# ---------------------------------------------------------------------------
def unet_decoder_forward(features_nchw, blocks, final_params):
    """features_nchw: [encoder_head, skip_0, skip_1, ...] (deepest first), NCHW,
    exactly like UnetDecoder.forward."""
    roll_fwd = _roll_matches_jnp()
    feats = []
    for f in features_nchw:
        n, c, h, w = f.shape
        # NCHW -> (N, C, H*W) is a free reshape; bf16 halves HBM traffic.
        feats.append((f.astype(jnp.bfloat16).reshape(n, c, h * w), h, w))

    x, h, w = feats[0]                                   # center = Identity
    skips = feats[1:]
    for i, convs in enumerate(blocks):
        H, W = 2 * h, 2 * w
        skip = skips[i][0] if i < len(skips) else None
        fin = final_params if i == len(blocks) - 1 else None
        x = _decoder_block_call(x, skip, convs[0], convs[1], fin, H, W, roll_fwd)
        h, w = H, W
    return x.reshape(x.shape[0], x.shape[1], h, w)       # NCHW (free reshape)


# ---------------------------------------------------------------------------
# Pure-JAX f32 NCHW reference (BN folded) for validation.
# ---------------------------------------------------------------------------
def reference_forward(features_nchw, blocks, final_params):
    x = features_nchw[0]
    skips = features_nchw[1:]
    for i, convs in enumerate(blocks):
        x = jnp.repeat(jnp.repeat(x, 2, axis=2), 2, axis=3)   # nearest 2x
        if i < len(skips):
            x = jnp.concatenate([x, skips[i]], axis=1)
        for c in convs:
            x = jax.lax.conv_general_dilated(
                x, c["w_oihw"], (1, 1), ((1, 1), (1, 1)),
                dimension_numbers=("NCHW", "OIHW", "NCHW"))
            x = jnp.maximum(x + c["b"].reshape(1, -1, 1, 1), 0.0)
    y = jax.lax.conv_general_dilated(
        x, final_params["w_oihw"], (1, 1), ((0, 0), (0, 0)),
        dimension_numbers=("NCHW", "OIHW", "NCHW"))
    return y + final_params["b"].reshape(1, -1, 1, 1)


# ---------------------------------------------------------------------------
if __name__ == "__main__":
    key = jax.random.PRNGKey(0)
    kp, k1, k2, k3 = jax.random.split(key, 4)

    # Small synthetic configuration (3-level encoder pyramid, deepest first).
    encoder_channels = (32, 16, 8)
    decoder_channels = (32, 16, 8)
    final_channels = 1
    N = 2

    blocks, final_params = init_unet_decoder_params(
        kp, encoder_channels, decoder_channels, final_channels)

    encoder_head = jax.random.normal(k1, (N, 32, 4, 4), jnp.float32)
    skip0 = jax.random.normal(k2, (N, 16, 8, 8), jnp.float32)
    skip1 = jax.random.normal(k3, (N, 8, 16, 16), jnp.float32)
    feats = [encoder_head, skip0, skip1]

    _roll_matches_jnp()          # run the tiny convention probe outside jit

    fwd = jax.jit(lambda fs: unet_decoder_forward(fs, blocks, final_params))
    out = jax.block_until_ready(fwd(feats))

    # 4x4 -> (x2)^3 = 32x32, final_channels = 1
    assert out.shape == (N, final_channels, 32, 32), out.shape
    assert bool(jnp.all(jnp.isfinite(out)))

    # bf16 activations/weights vs the f32 reference -> loose tolerance; a
    # structural bug (wrong tap order / masks / concat) would be O(1) off.
    ref = reference_forward(feats, blocks, final_params)
    err = float(jnp.max(jnp.abs(out.astype(jnp.float32) - ref)))
    tol = 0.05 * float(jnp.max(jnp.abs(ref))) + 0.05
    assert err < tol, f"max |pallas - reference| = {err} (tol {tol})"
    print("KERNEL_OK")
</pallas_src>

<mosaic_0001>
module attributes {stable_mosaic.version = 11 : i64} {
  func.func @k(%arg0: memref<8x128xf32, #tpu.memory_space<vmem>>, %arg1: memref<8x128xf32, #tpu.memory_space<vmem>>) attributes {dimension_semantics = [], scalar_prefetch = 0 : i64, scratch_operands = 0 : i64, tpu.core_type = #tpu.core_type<tc>} {
    %c0 = arith.constant 0 : index
    %c0_0 = arith.constant 0 : index
    %0 = vector.load %arg0[%c0, %c0_0] : memref<8x128xf32, #tpu.memory_space<vmem>>, vector<8x128xf32>
    %c1_i32 = arith.constant 1 : i32
    %1 = tpu.dynamic_rotate %0 by %c1_i32 dim 1 : vector<8x128xf32>, i32 -> vector<8x128xf32>
    %c0_1 = arith.constant 0 : index
    %c0_2 = arith.constant 0 : index
    %2 = vector.load %arg1[%c0_1, %c0_2] : memref<8x128xf32, #tpu.memory_space<vmem>>, vector<8x128xf32>
    tpu.vector_store %arg1[%c0_1, %c0_2], %1 {strides = array<i32>} : memref<8x128xf32, #tpu.memory_space<vmem>>, vector<8x128xf32>,
    return
  }
}

</mosaic_0001>

<llo_original>
// kernel: tpu_custom_call.1
$region0: #{tpu_custom_call.1}
  #allocation0 [shape = 'u32[]', space=smem, size = 0x4, offset = 0x4, fixed_abs, tag = 'smem constant byte address 0x4 - core index']
  #allocation1 [shape = 'u32[72,128]{1,0:T(1,128)}', space=vmem, size = 0x9000, scoped, tag = 'internal scratch']
  %s0 = inlined_call_operand.hbm [shape: f32[8,128], index: 0, kind: input, shape index: {}]
  %s1 = inlined_call_operand.hbm [shape: f32[8,128], index: 1, kind: output, shape index: {}]
  %s2 = sld [smem:[#allocation0]]
  $region18: #{tpu_custom_call.1} parent=0
    _
  %s4 = ssub.s32 1, %s2
  %s5 = scalar_select 0, %s4, %s2
  $region1: #{tpu_custom_call.1} parent=0
    #allocation2 [shape = 'u8[4096]{0}', space=vmem, size = 0x1000, scoped, tag = 'input window, operand 0, single buffered']
    #allocation3 [shape = 's32[1]{0}', space=sflag, size = 0x4, scoped, tag = 'scoped memory for tpu_custom_call.1']
    #allocation4 [shape = 's32[1]{0}', space=sflag, size = 0x4, scoped, tag = 'scoped memory for tpu_custom_call.1']
    #allocation5 [shape = 'u8[4096]{0}', space=vmem, size = 0x1000, scoped, tag = 'output window, operand 0, single buffered']
    %6 = vsyncpa [#allocation3], 0
    %7 = vsyncpa [#allocation4], 0
    // Predicated region
    $region2: #{tpu_custom_call.1} parent=1 // pred_check
      _
    $region3: #{tpu_custom_call.1} parent=1 // pred_check_branch
      %9 = sbr.rel (0) target = $region5
    $region4: #{tpu_custom_call.1} parent=1 // pred_region
      %11 = vsyncadd [#allocation3], 0
      %s13 = sshll.u32 %s0, 4
      %s14 = int_to_ptr.hbm [resolvable:$true] %s13
      %s15 = sshll.u32 [#allocation2], 4
      %s16 = int_to_ptr.vmem [resolvable:$true] %s15
      %18 = dma.hbm_to_vmem [thread:$0]  %s14, 128, %s16, [#allocation3]
    $region5: #{tpu_custom_call.1} parent=1 // pred_fallthru
      _
    // Predicated region
    $region6: #{tpu_custom_call.1} parent=1 // pred_check
      _
    $region7: #{tpu_custom_call.1} parent=1 // pred_check_branch
      %20 = sbr.rel (0) target = $region9
    $region8: #{tpu_custom_call.1} parent=1 // pred_region
      %22 = dma.done [#allocation3], 128
    $region9: #{tpu_custom_call.1} parent=1 // pred_fallthru
      _
    %v23 = vld [vmem:[#allocation2] sm:$0xff]
    %24 = vrot.lane.b32.xlu0 %v23, 1
    %v25 = vpop.permute.xlu0 %24
    %26 = vst [vmem:[#allocation5] sm:$0xff] %v25
    // Predicated region
    $region10: #{tpu_custom_call.1} parent=1 // pred_check
      _
    $region11: #{tpu_custom_call.1} parent=1 // pred_check_branch
      %28 = sbr.rel (0) target = $region13
    $region12: #{tpu_custom_call.1} parent=1 // pred_region
      %30 = vsyncadd [#allocation4], 0
      %s32 = sshll.u32 [#allocation5], 4
      %s33 = int_to_ptr.vmem [resolvable:$true] %s32
      %s34 = sshll.u32 %s1, 4
      %s35 = int_to_ptr.hbm [resolvable:$true] %s34
      %37 = dma.vmem_to_hbm [thread:$0]  %s33, 128, %s35, [#allocation4]
    $region13: #{tpu_custom_call.1} parent=1 // pred_fallthru
      _
    // Predicated region
    $region14: #{tpu_custom_call.1} parent=1 // pred_check
      _
    $region15: #{tpu_custom_call.1} parent=1 // pred_check_branch
      %39 = sbr.rel (0) target = $region17
    $region16: #{tpu_custom_call.1} parent=1 // pred_region
      %41 = dma.done [#allocation4], 128
    $region17: #{tpu_custom_call.1} parent=1 // pred_fallthru
      _
    %42 = vsyncpa [#allocation3], 1
    %43 = vsyncpa [#allocation4], 1

</llo_original>
